<compile_context>
chip_gen: v5e
topology: v5e:2x2
jax: 0.10.0
libtpu: 0.0.40
codegen_flags: <defaults>
</compile_context>

<pallas_src>
import functools

import jax
import jax.numpy as jnp
from jax import lax
from jax.experimental import pallas as pl
from jax.experimental.pallas import tpu as pltpu


def _ce_kernel(preds_ref, target_ref, w_ref, out_ref, loss_acc, wsum_acc,
               *, hw, ragged):
    i = pl.program_id(1)

    @pl.when(i == 0)
    def _():
        loss_acc[...] = jnp.zeros_like(loss_acc)
        wsum_acc[...] = jnp.zeros_like(wsum_acc)

    logits = preds_ref[...].astype(jnp.float32)      # (Nb, C, T) f32 (cast in-kernel)
    target = target_ref[...]                         # (Nb, 1, T) int32
    Nb, C, T = logits.shape

    if ragged:
        # Mask lanes past the end of the (possibly ragged) pixel axis; keeps any
        # stale/padded logits finite before max/exp.
        lane = lax.broadcasted_iota(jnp.int32, (1, 1, T), 2)
        valid = (i * T + lane) < hw                  # (1, 1, T) bool
        logits = jnp.where(valid, logits, 0.0)

    # Weighted one-hot of the target class along the (small) class/sublane axis.
    class_ids = lax.broadcasted_iota(jnp.int32, (Nb, C, T), 1)
    w_b = w_ref[...][None, :, :]                     # (1, C, 1)
    w_onehot = jnp.where(class_ids == target, w_b, 0.0)         # (Nb, C, T)

    # Numerically stable log-softmax over the class axis.
    m = jnp.max(logits, axis=1, keepdims=True)                   # (Nb, 1, T)
    shifted = logits - m
    lse = jnp.log(jnp.sum(jnp.exp(shifted), axis=1, keepdims=True))  # (Nb, 1, T)
    w_sel = jnp.sum(w_onehot * shifted, axis=1, keepdims=True)       # w[t]*shifted[t]
    w_pix = jnp.sum(w_onehot, axis=1, keepdims=True)                 # w[t]

    contrib = w_pix * lse - w_sel                                    # w[t]*nll
    if ragged:
        maskf = valid.astype(jnp.float32)
        contrib = contrib * maskf
        w_pix = w_pix * maskf

    loss_acc[...] += jnp.sum(contrib, axis=0)        # (1, T)
    wsum_acc[...] += jnp.sum(w_pix, axis=0)          # (1, T)

    @pl.when(i == pl.num_programs(1) - 1)
    def _():
        # Per-batch-block partial sums; final combine happens in plain JAX so
        # the batch grid axis can be "parallel" (megacore on v7x).
        out_ref[0, 0] = jnp.sum(loss_acc[...])
        out_ref[0, 1] = jnp.sum(wsum_acc[...])


def cross_entropy_loss(preds, target, weights=None, tile=None):
    """preds: (N, C, H, W) float logits (any float dtype); target: (N, H, W) int
    class ids; weights: optional (C,) per-class weights. Returns scalar CE loss
    (weighted mean, torch.nn.functional.cross_entropy semantics).
    NaN if all per-pixel class weights are zero (matches torch)."""
    N, C, H, W = preds.shape
    HW = H * W

    # Free reshapes only: no transpose, no dtype upcast in the wrapper.
    preds_f = preds.reshape(N, C, HW)
    target_f = target.reshape(N, 1, HW).astype(jnp.int32)
    if weights is None:
        w = jnp.ones((C, 1), jnp.float32)
    else:
        w = jnp.asarray(weights, jnp.float32).reshape(C, 1)

    # --- Tile selection -------------------------------------------------------
    # Budget the f32 working slab (C * tile * 4B) at ~2 MiB: big enough to
    # amortize the ~0.35us per-step overhead, small enough that double-buffered
    # inputs + in-kernel f32 temporaries stay well under v7x's 32 MiB scoped VMEM.
    F32_BUDGET = 2 * 1024 * 1024
    if tile is None:
        tile_max = max(128, (F32_BUDGET // (C * 4)) // 128 * 128)
        hw_pad = pl.cdiv(HW, 128) * 128
        if hw_pad <= tile_max:
            tile = hw_pad                        # single pixel tile per image
        else:
            tile = None
            if HW % 128 == 0:
                # Prefer a tile that divides HW exactly -> no ragged masking.
                cand = tile_max
                while cand >= max(128, tile_max // 2):
                    if HW % cand == 0:
                        tile = cand
                        break
                    cand -= 128
            if tile is None:
                tile = tile_max
    else:
        tile = max(128, (tile // 128) * 128)
        tile = min(tile, pl.cdiv(HW, 128) * 128)

    n_tiles = pl.cdiv(HW, tile)
    ragged = (HW % tile) != 0

    # For small feature maps (one pixel tile covers the whole image), widen the
    # block over the batch axis so each grid step moves several images.
    Nb = 1
    if n_tiles == 1:
        for d in range(N, 0, -1):
            if N % d == 0 and d * C * tile * 4 <= F32_BUDGET:
                Nb = d
                break
    n_batch_blocks = N // Nb

    kernel = functools.partial(_ce_kernel, hw=HW, ragged=ragged)

    partials = pl.pallas_call(
        kernel,
        out_shape=jax.ShapeDtypeStruct((n_batch_blocks, 2), jnp.float32),
        grid_spec=pltpu.PrefetchScalarGridSpec(
            num_scalar_prefetch=0,
            grid=(n_batch_blocks, n_tiles),
            in_specs=[
                pl.BlockSpec((Nb, C, tile), lambda b, i: (b, 0, i)),
                pl.BlockSpec((Nb, 1, tile), lambda b, i: (b, 0, i)),
                pl.BlockSpec((C, 1), lambda b, i: (0, 0)),
            ],
            out_specs=pl.BlockSpec((1, 2), lambda b, i: (b, 0),
                                   memory_space=pltpu.MemorySpace.SMEM),
            scratch_shapes=[
                pltpu.VMEM((1, tile), jnp.float32),   # weighted-nll partial sums
                pltpu.VMEM((1, tile), jnp.float32),   # weight partial sums
            ],
        ),
        compiler_params=pltpu.CompilerParams(
            dimension_semantics=("parallel", "arbitrary")),
    )(preds_f, target_f, w)

    return jnp.sum(partials[:, 0]) / jnp.sum(partials[:, 1])


def _ref_cross_entropy(preds, target, weights=None):
    """Pure-JAX reference mirroring F.cross_entropy(reduction='mean', weight=weights)."""
    logp = jax.nn.log_softmax(preds.astype(jnp.float32), axis=1)
    tgt = target.astype(jnp.int32)
    nll = -jnp.take_along_axis(logp, tgt[:, None, :, :], axis=1)[:, 0]   # (N, H, W)
    if weights is None:
        return jnp.mean(nll)
    w = jnp.asarray(weights, jnp.float32)[tgt]
    return jnp.sum(w * nll) / jnp.sum(w)


if __name__ == "__main__":
    # TODO(synk): .item() (as_loss=False) and Variable/requires_grad are PyTorch
    # host-scalar / autograd plumbing with no kernel-level equivalent; the
    # ignore_index=255 path belongs to ce_loss(), which the module forward never calls.
    key = jax.random.PRNGKey(0)
    k_pred, k_tgt, k_w = jax.random.split(key, 3)

    N, C, H, W = 2, 4, 16, 16
    preds = jax.random.normal(k_pred, (N, C, H, W), dtype=jnp.float32)
    target = jax.random.randint(k_tgt, (N, H, W), 0, C, dtype=jnp.int32)

    # Default module config: weights=None.
    loss = jax.block_until_ready(cross_entropy_loss(preds, target, weights=None))
    ref = _ref_cross_entropy(preds, target, weights=None)
    assert jnp.allclose(loss, ref, atol=1e-5, rtol=1e-5), (loss, ref)

    # Weighted variant (CrossEntropyLoss(weights=...)).
    class_w = jax.random.uniform(k_w, (C,), dtype=jnp.float32, minval=0.5, maxval=2.0)
    loss_w = jax.block_until_ready(cross_entropy_loss(preds, target, weights=class_w))
    ref_w = _ref_cross_entropy(preds, target, weights=class_w)
    assert jnp.allclose(loss_w, ref_w, atol=1e-5, rtol=1e-5), (loss_w, ref_w)

    # Native bf16 logits path (no wrapper upcast; kernel casts to f32 internally).
    preds_bf16 = preds.astype(jnp.bfloat16)
    loss_b = jax.block_until_ready(cross_entropy_loss(preds_bf16, target, weights=class_w))
    ref_b = _ref_cross_entropy(preds_bf16, target, weights=class_w)
    assert jnp.allclose(loss_b, ref_b, atol=1e-3, rtol=1e-3), (loss_b, ref_b)

    print("KERNEL_OK")
</pallas_src>

<mosaic_0001>
module attributes {stable_mosaic.version = 11 : i64} {
  func.func @_ce_kernel(%arg0: i32, %arg1: i32, %arg2: memref<2x4x256xf32, #tpu.memory_space<vmem>>, %arg3: memref<2x1x256xi32, #tpu.memory_space<vmem>>, %arg4: memref<4x1xf32, #tpu.memory_space<vmem>>, %arg5: memref<1x2xf32, #tpu.memory_space<smem>>, %arg6: memref<1x256xf32, #tpu.memory_space<vmem>>, %arg7: memref<1x256xf32, #tpu.memory_space<vmem>>) attributes {dimension_semantics = [#tpu.dimension_semantics<parallel>, #tpu.dimension_semantics<arbitrary>], iteration_bounds = array<i64: 1, 1>, scalar_prefetch = 0 : i64, scratch_operands = 2 : i64, tpu.core_type = #tpu.core_type<tc>, window_params = [{transform_indices = @transform_0, window_bounds = array<i64: 2, 4, 256>}, {transform_indices = @transform_1, window_bounds = array<i64: 2, 1, 256>}, {pipeline_mode = #tpu.pipeline_mode<synchronous>, transform_indices = @transform_2, window_bounds = array<i64: 4, 1>}, {transform_indices = @transform_3, window_bounds = array<i64: 1, 2>}]} {
    %c0_i32 = arith.constant 0 : i32
    %0 = arith.cmpi eq, %arg1, %c0_i32 : i32
    %1 = arith.extui %0 : i1 to i32
    %c0_i32_0 = arith.constant 0 : i32
    %2 = arith.cmpi ne, %1, %c0_i32_0 : i32
    scf.if %2 {
      %cst_24 = arith.constant 0.000000e+00 : f32
      %40 = vector.broadcast %cst_24 : f32 to vector<1x256xf32>
      %c0_25 = arith.constant 0 : index
      %c0_26 = arith.constant 0 : index
      %41 = vector.load %arg6[%c0_25, %c0_26] : memref<1x256xf32, #tpu.memory_space<vmem>>, vector<1x256xf32>
      tpu.vector_store %arg6[%c0_25, %c0_26], %40 {strides = array<i32>} : memref<1x256xf32, #tpu.memory_space<vmem>>, vector<1x256xf32>,
      %cst_27 = arith.constant 0.000000e+00 : f32
      %42 = vector.broadcast %cst_27 : f32 to vector<1x256xf32>
      %c0_28 = arith.constant 0 : index
      %c0_29 = arith.constant 0 : index
      %43 = vector.load %arg7[%c0_28, %c0_29] : memref<1x256xf32, #tpu.memory_space<vmem>>, vector<1x256xf32>
      tpu.vector_store %arg7[%c0_28, %c0_29], %42 {strides = array<i32>} : memref<1x256xf32, #tpu.memory_space<vmem>>, vector<1x256xf32>,
    } else {
    }
    %c0 = arith.constant 0 : index
    %c0_1 = arith.constant 0 : index
    %c0_2 = arith.constant 0 : index
    %3 = vector.load %arg2[%c0, %c0_1, %c0_2] : memref<2x4x256xf32, #tpu.memory_space<vmem>>, vector<2x4x256xf32>
    %c0_3 = arith.constant 0 : index
    %c0_4 = arith.constant 0 : index
    %c0_5 = arith.constant 0 : index
    %4 = vector.load %arg3[%c0_3, %c0_4, %c0_5] : memref<2x1x256xi32, #tpu.memory_space<vmem>>, vector<2x1x256xi32>
    %5 = tpu.iota {dimensions = array<i32: 1>} : vector<2x4x256xi32>
    %c0_6 = arith.constant 0 : index
    %c0_7 = arith.constant 0 : index
    %6 = vector.load %arg4[%c0_6, %c0_7] : memref<4x1xf32, #tpu.memory_space<vmem>>, vector<4x1xf32>
    %7 = vector.shape_cast %6 : vector<4x1xf32> to vector<1x4x1xf32>
    %8 = vector.broadcast %4 : vector<2x1x256xi32> to vector<2x4x256xi32>
    %9 = arith.cmpi eq, %5, %8 : vector<2x4x256xi32>
    %cst = arith.constant 0.000000e+00 : f32
    %10 = vector.shape_cast %7 : vector<1x4x1xf32> to vector<1x4x1xf32>
    %11 = vector.broadcast %10 : vector<1x4x1xf32> to vector<2x4x256xf32>
    %12 = vector.broadcast %cst : f32 to vector<2x4x256xf32>
    %13 = arith.select %9, %11, %12 : vector<2x4x256xi1>, vector<2x4x256xf32>
    %cst_8 = arith.constant dense<0xFF800000> : vector<2x256xf32>
    %14 = vector.multi_reduction <maximumf>, %3, %cst_8 [1] : vector<2x4x256xf32> to vector<2x256xf32>
    %15 = vector.shape_cast %14 : vector<2x256xf32> to vector<2x1x256xf32>
    %16 = vector.broadcast %15 : vector<2x1x256xf32> to vector<2x4x256xf32>
    %17 = arith.subf %3, %16 : vector<2x4x256xf32>
    %18 = math.exp %17 : vector<2x4x256xf32>
    %cst_9 = arith.constant dense<0.000000e+00> : vector<2x256xf32>
    %19 = vector.multi_reduction <add>, %18, %cst_9 [1] : vector<2x4x256xf32> to vector<2x256xf32>
    %20 = vector.shape_cast %19 : vector<2x256xf32> to vector<2x1x256xf32>
    %21 = math.log %20 : vector<2x1x256xf32>
    %22 = arith.mulf %13, %17 : vector<2x4x256xf32>
    %cst_10 = arith.constant dense<0.000000e+00> : vector<2x256xf32>
    %23 = vector.multi_reduction <add>, %22, %cst_10 [1] : vector<2x4x256xf32> to vector<2x256xf32>
    %24 = vector.shape_cast %23 : vector<2x256xf32> to vector<2x1x256xf32>
    %cst_11 = arith.constant dense<0.000000e+00> : vector<2x256xf32>
    %25 = vector.multi_reduction <add>, %13, %cst_11 [1] : vector<2x4x256xf32> to vector<2x256xf32>
    %26 = vector.shape_cast %25 : vector<2x256xf32> to vector<2x1x256xf32>
    %27 = arith.mulf %26, %21 : vector<2x1x256xf32>
    %28 = arith.subf %27, %24 : vector<2x1x256xf32>
    %c0_12 = arith.constant 0 : index
    %c0_13 = arith.constant 0 : index
    %29 = vector.load %arg6[%c0_12, %c0_13] : memref<1x256xf32, #tpu.memory_space<vmem>>, vector<1x256xf32>
    %cst_14 = arith.constant dense<0.000000e+00> : vector<1x256xf32>
    %30 = vector.multi_reduction <add>, %28, %cst_14 [0] : vector<2x1x256xf32> to vector<1x256xf32>
    %31 = arith.addf %29, %30 : vector<1x256xf32>
    %c0_15 = arith.constant 0 : index
    %c0_16 = arith.constant 0 : index
    %32 = vector.load %arg6[%c0_15, %c0_16] : memref<1x256xf32, #tpu.memory_space<vmem>>, vector<1x256xf32>
    tpu.vector_store %arg6[%c0_15, %c0_16], %31 {strides = array<i32>} : memref<1x256xf32, #tpu.memory_space<vmem>>, vector<1x256xf32>,
    %c0_17 = arith.constant 0 : index
    %c0_18 = arith.constant 0 : index
    %33 = vector.load %arg7[%c0_17, %c0_18] : memref<1x256xf32, #tpu.memory_space<vmem>>, vector<1x256xf32>
    %cst_19 = arith.constant dense<0.000000e+00> : vector<1x256xf32>
    %34 = vector.multi_reduction <add>, %26, %cst_19 [0] : vector<2x1x256xf32> to vector<1x256xf32>
    %35 = arith.addf %33, %34 : vector<1x256xf32>
    %c0_20 = arith.constant 0 : index
    %c0_21 = arith.constant 0 : index
    %36 = vector.load %arg7[%c0_20, %c0_21] : memref<1x256xf32, #tpu.memory_space<vmem>>, vector<1x256xf32>
    tpu.vector_store %arg7[%c0_20, %c0_21], %35 {strides = array<i32>} : memref<1x256xf32, #tpu.memory_space<vmem>>, vector<1x256xf32>,
    %c0_i32_22 = arith.constant 0 : i32
    %37 = arith.cmpi eq, %arg1, %c0_i32_22 : i32
    %38 = arith.extui %37 : i1 to i32
    %c0_i32_23 = arith.constant 0 : i32
    %39 = arith.cmpi ne, %38, %c0_i32_23 : i32
    scf.if %39 {
      %c0_24 = arith.constant 0 : index
      %c0_25 = arith.constant 0 : index
      %40 = vector.load %arg6[%c0_24, %c0_25] : memref<1x256xf32, #tpu.memory_space<vmem>>, vector<1x256xf32>
      %41 = vector.shape_cast %40 : vector<1x256xf32> to vector<1x1x256xf32>
      %cst_26 = arith.constant dense<0.000000e+00> : vector<1xf32>
      %42 = vector.multi_reduction <add>, %41, %cst_26 [1, 2] : vector<1x1x256xf32> to vector<1xf32>
      %43 = vector.shape_cast %42 : vector<1xf32> to vector<1x1x1xf32>
      %44 = vector.extract %43[0, 0, 0] : f32 from vector<1x1x1xf32>
      %c0_27 = arith.constant 0 : index
      %c0_28 = arith.constant 0 : index
      %45 = memref.load %arg5[%c0_27, %c0_28] : memref<1x2xf32, #tpu.memory_space<smem>>
      memref.store %44, %arg5[%c0_27, %c0_28] : memref<1x2xf32, #tpu.memory_space<smem>>
      %c0_29 = arith.constant 0 : index
      %c0_30 = arith.constant 0 : index
      %46 = vector.load %arg7[%c0_29, %c0_30] : memref<1x256xf32, #tpu.memory_space<vmem>>, vector<1x256xf32>
      %47 = vector.shape_cast %46 : vector<1x256xf32> to vector<1x1x256xf32>
      %cst_31 = arith.constant dense<0.000000e+00> : vector<1xf32>
      %48 = vector.multi_reduction <add>, %47, %cst_31 [1, 2] : vector<1x1x256xf32> to vector<1xf32>
      %49 = vector.shape_cast %48 : vector<1xf32> to vector<1x1x1xf32>
      %50 = vector.extract %49[0, 0, 0] : f32 from vector<1x1x1xf32>
      %c0_32 = arith.constant 0 : index
      %c1 = arith.constant 1 : index
      %51 = memref.load %arg5[%c0_32, %c1] : memref<1x2xf32, #tpu.memory_space<smem>>
      memref.store %50, %arg5[%c0_32, %c1] : memref<1x2xf32, #tpu.memory_space<smem>>
    } else {
    }
    return
  }
  func.func @transform_0(%arg0: i32, %arg1: i32) -> (i32, i32, i32) {
    %c0_i32 = arith.constant 0 : i32
    %c0_i32_0 = arith.constant 0 : i32
    return %arg0, %c0_i32, %arg1 : i32, i32, i32
  }
  func.func @transform_1(%arg0: i32, %arg1: i32) -> (i32, i32, i32) {
    %c0_i32 = arith.constant 0 : i32
    %c0_i32_0 = arith.constant 0 : i32
    return %arg0, %c0_i32, %arg1 : i32, i32, i32
  }
  func.func @transform_2(%arg0: i32, %arg1: i32) -> (i32, i32) {
    %c0_i32 = arith.constant 0 : i32
    %c0_i32_0 = arith.constant 0 : i32
    %c0_i32_1 = arith.constant 0 : i32
    return %c0_i32, %c0_i32_0 : i32, i32
  }
  func.func @transform_3(%arg0: i32, %arg1: i32) -> (i32, i32) {
    %c0_i32 = arith.constant 0 : i32
    %c0_i32_0 = arith.constant 0 : i32
    return %arg0, %c0_i32 : i32, i32
  }
}

</mosaic_0001>

<llo_original>
// kernel: tpu_custom_call.1
$region0: #{tpu_custom_call.1}
  #allocation0 [shape = 'u32[]', space=smem, size = 0x4, offset = 0x4, fixed_abs, tag = 'smem constant byte address 0x4 - core index']
  #allocation1 [shape = 'u32[72,128]{1,0:T(1,128)}', space=vmem, size = 0x9000, scoped, tag = 'internal scratch']
  #allocation2 [shape = 'f32[1,256]{1,0:T(1,128)}', space=vmem, size = 0x400, scoped, tag = 'scratch operand']
  #allocation3 [shape = 'f32[1,256]{1,0:T(1,128)}', space=vmem, size = 0x400, scoped, tag = 'scratch operand']
  %s0 = inlined_call_operand.hbm [shape: f32[2,4,256], index: 0, kind: input, shape index: {}]
  %s1 = inlined_call_operand.vmem [shape: s32[2,1,256], index: 1, kind: input, shape index: {}]
  %s2 = inlined_call_operand.vmem [shape: f32[4,1], index: 2, kind: input, shape index: {}]
  %s3 = inlined_call_operand.hbm [shape: f32[1,2], index: 3, kind: output, shape index: {}]
  %s4 = sld [smem:[#allocation0]]
  $region34: #{tpu_custom_call.1} parent=0
    _
  %s6 = ssub.s32 1, %s4
  %s7 = scalar_select 0, %s6, %s4
  $region1: #{tpu_custom_call.1} parent=0
    #allocation4 [shape = 'u8[8192]{0}', space=vmem, size = 0x2000, scoped, tag = 'input window, operand 0, single buffered']
    #allocation5 [shape = 's32[1]{0}', space=sflag, size = 0x4, scoped, tag = 'scoped memory for tpu_custom_call.1']
    #allocation6 [shape = 's32[1]{0}', space=sflag, size = 0x4, scoped, tag = 'scoped memory for tpu_custom_call.1']
    #allocation7 [shape = 'u8[512]{0}', space=smem, size = 0x200, scoped, tag = 'output window, operand 0, single buffered']
    %8 = vsyncpa [#allocation5], 0
    %9 = vsyncpa [#allocation6], 0
    // Predicated region
    $region2: #{tpu_custom_call.1} parent=1 // pred_check
      _
    $region3: #{tpu_custom_call.1} parent=1 // pred_check_branch
      %11 = sbr.rel (0) target = $region5
    $region4: #{tpu_custom_call.1} parent=1 // pred_region
      %13 = vsyncadd [#allocation5], 0
      %s14 = sshll.u32 %s0, 4
      %s15 = int_to_ptr.hbm [resolvable:$true] %s14
      %s16 = sshll.u32 [#allocation4], 4
      %s17 = int_to_ptr.vmem [resolvable:$true] %s16
      %22 = dma.hbm_to_vmem [thread:$0]  %s15, 256, %s17, [#allocation5], 128, 128, 8
    $region5: #{tpu_custom_call.1} parent=1 // pred_fallthru
      _
    // Predicated region
    $region6: #{tpu_custom_call.1} parent=1 // pred_check
      _
    $region7: #{tpu_custom_call.1} parent=1 // pred_check_branch
      %24 = sbr.rel (0) target = $region9
    $region8: #{tpu_custom_call.1} parent=1 // pred_region
      _
    $region9: #{tpu_custom_call.1} parent=1 // pred_fallthru
      _
    // Predicated region
    $region10: #{tpu_custom_call.1} parent=1 // pred_check
      _
    $region11: #{tpu_custom_call.1} parent=1 // pred_check_branch
      %26 = sbr.rel (0) target = $region13
    $region12: #{tpu_custom_call.1} parent=1 // pred_region
      _
    $region13: #{tpu_custom_call.1} parent=1 // pred_fallthru
      _
    // Predicated region
    $region14: #{tpu_custom_call.1} parent=1 // pred_check
      _
    $region15: #{tpu_custom_call.1} parent=1 // pred_check_branch
      %28 = sbr.rel (0) target = $region17
    $region16: #{tpu_custom_call.1} parent=1 // pred_region
      %30 = dma.done [#allocation5], 256
    $region17: #{tpu_custom_call.1} parent=1 // pred_fallthru
      _
    %p31 = scmp.eq.s32.totalorder 0, 0
    // Predicated region
    $region18: #{tpu_custom_call.1} parent=1 // pred_check
      %p32 = pneg %p31
    $region19: #{tpu_custom_call.1} parent=1 // pred_check_branch
      %34 = sbr.rel (%p32) target = $region21
    $region20: #{tpu_custom_call.1} parent=1 // pred_region
      %v35 = vlaneseq
      %vm36 = vcmp.ge.s32.totalorder %v35, 0
      %vm37 = vcmp.lt.s32.totalorder %v35, 256
      %vm38 = vmand %vm36, %vm37
      %39 = vst.msk [vmem:[#allocation2] sm:$0x3] %vm38, 0.0
      %40 = vst.msk [vmem:[#allocation3] sm:$0x3] %vm38, 0.0
    $region21: #{tpu_custom_call.1} parent=1 // pred_fallthru
      _
    %v41 = vld [vmem:[#allocation4] sm:$0xff]
    %v42 = vld [vmem:[#allocation4 + $0x8] sm:$0xff]
    %v43 = vld [vmem:[%s1] sm:$0x3]
    %v44 = vld [vmem:[%s1 + $0x2] sm:$0x3]
    %v45 = vlaneseq
    %v46 = vshrl.u32 %v45, 7
    %v47 = vld [vmem:[%s2] sm:$0xf]
    %v48 = vperm.slane %v43, 0
    %v49 = vperm.slane %v43, 1
    %v50 = vperm.slane %v44, 0
    %v51 = vperm.slane %v44, 1
    %vm52 = vcmp.eq.s32.totalorder %v46, %v48
    %vm53 = vcmp.eq.s32.totalorder %v46, %v49
    %vm54 = vcmp.eq.s32.totalorder %v46, %v50
    %vm55 = vcmp.eq.s32.totalorder %v46, %v51
    %57 = vset.pattern.permute.xlu0 0
    %58 = vperm.xlu0 %57, %v47
    %v59 = vpop.permute.xlu0 %58
    %v61 = vsel %vm52, %v59, 0.0
    %v62 = vsel %vm53, %v59, 0.0
    %v63 = vsel %vm54, %v59, 0.0
    %v64 = vsel %vm55, %v59, 0.0
    %67 = vst [vmem:[#allocation1] ss:$2 sm:$0xff] %v41
    %v68 = vld.sshfl [vmem:[#allocation1] sm:$0xff pattern:$0x75316420]
    %v69 = vld.sshfl [vmem:[#allocation1 + $0x8] sm:$0xff pattern:$0x75316420]
    %s70 = scalar_lea.vmem [#allocation1], 16
    %71 = vst [vmem:[%s70] ss:$2 sm:$0xff] %v42
    %v72 = vld.sshfl [vmem:[#allocation1 + $0x10] sm:$0xff pattern:$0x75316420]
    %v73 = vld.sshfl [vmem:[#allocation1 + $0x18] sm:$0xff pattern:$0x75316420]
    %vm78 = vcmask 1043456
    %v79 = vsel %vm78, %v68, -inf
    %v80 = vrot.slane %v79, 4
    %v81 = vmax.f32 %v79, %v80
    %v82 = vrot.slane %v81, 2
    %v83 = vmax.f32 %v81, %v82
    %v84 = vrot.slane %v83, 1
    %v85 = vmax.f32 %v83, %v84
    %v86 = vsel %vm78, %v69, -inf
    %v87 = vrot.slane %v86, 4
    %v88 = vmax.f32 %v86, %v87
    %v89 = vrot.slane %v88, 2
    %v90 = vmax.f32 %v88, %v89
    %v91 = vrot.slane %v90, 1
    %v92 = vmax.f32 %v90, %v91
    %v93 = vsel %vm78, %v72, -inf
    %v94 = vrot.slane %v93, 4
    %v95 = vmax.f32 %v93, %v94
    %v96 = vrot.slane %v95, 2
    %v97 = vmax.f32 %v95, %v96
    %v98 = vrot.slane %v97, 1
    %v99 = vmax.f32 %v97, %v98
    %v100 = vsel %vm78, %v73, -inf
    %v101 = vrot.slane %v100, 4
    %v102 = vmax.f32 %v100, %v101
    %v103 = vrot.slane %v102, 2
    %v104 = vmax.f32 %v102, %v103
    %v105 = vrot.slane %v104, 1
    %v106 = vmax.f32 %v104, %v105
    %v111 = vrot.slane %v92, 4
    %v112 = vrot.slane %v106, 4
    %v113 = vsel %vm78, %v85, %v111
    %v114 = vsel %vm78, %v99, %v112
    %v117 = vsub.f32 %v41, %v113
    %v118 = vsub.f32 %v42, %v114
    %v119 = vmul.f32 %v117, 1.442695
    %v120 = vpow.pop %v119
    %v121 = vmul.f32 %v118, 1.442695
    %v122 = vpow.pop %v121
    %125 = vst [vmem:[#allocation1] ss:$2 sm:$0xff] %v120
    %v126 = vld.sshfl [vmem:[#allocation1] sm:$0xff pattern:$0x75316420]
    %v127 = vld.sshfl [vmem:[#allocation1 + $0x8] sm:$0xff pattern:$0x75316420]
    %s128 = scalar_lea.vmem [#allocation1], 16
    %129 = vst [vmem:[%s128] ss:$2 sm:$0xff] %v122
    %v130 = vld.sshfl [vmem:[#allocation1 + $0x10] sm:$0xff pattern:$0x75316420]
    %v131 = vld.sshfl [vmem:[#allocation1 + $0x18] sm:$0xff pattern:$0x75316420]
    %v136 = vsel %vm78, %v126, 0.0
    %v137 = vrot.slane %v136, 4
    %v138 = vadd.f32 %v136, %v137
    %v139 = vrot.slane %v138, 2
    %v140 = vadd.f32 %v138, %v139
    %v141 = vrot.slane %v140, 1
    %v142 = vadd.f32 %v140, %v141
    %v143 = vsel %vm78, %v127, 0.0
    %v144 = vrot.slane %v143, 4
    %v145 = vadd.f32 %v143, %v144
    %v146 = vrot.slane %v145, 2
    %v147 = vadd.f32 %v145, %v146
    %v148 = vrot.slane %v147, 1
    %v149 = vadd.f32 %v147, %v148
    %v150 = vsel %vm78, %v130, 0.0
    %v151 = vrot.slane %v150, 4
    %v152 = vadd.f32 %v150, %v151
    %v153 = vrot.slane %v152, 2
    %v154 = vadd.f32 %v152, %v153
    %v155 = vrot.slane %v154, 1
    %v156 = vadd.f32 %v154, %v155
    %v157 = vsel %vm78, %v131, 0.0
    %v158 = vrot.slane %v157, 4
    %v159 = vadd.f32 %v157, %v158
    %v160 = vrot.slane %v159, 2
    %v161 = vadd.f32 %v159, %v160
    %v162 = vrot.slane %v161, 1
    %v163 = vadd.f32 %v161, %v162
    %v164 = vlog2.pop %v142
    %v165 = vmul.f32 %v164, 0.6931472
    %v166 = vlog2.pop %v149
    %v167 = vmul.f32 %v166, 0.6931472
    %v168 = vlog2.pop %v156
    %v169 = vmul.f32 %v168, 0.6931472
    %v170 = vlog2.pop %v163
    %v171 = vmul.f32 %v170, 0.6931472
    %174 = vst [vmem:[#allocation1] ss:$2 sm:$0xff] %v117
    %v175 = vld.sshfl [vmem:[#allocation1] sm:$0xff pattern:$0x75316420]
    %v176 = vld.sshfl [vmem:[#allocation1 + $0x8] sm:$0xff pattern:$0x75316420]
    %s177 = scalar_lea.vmem [#allocation1], 16
    %178 = vst [vmem:[%s177] ss:$2 sm:$0xff] %v118
    %v179 = vld.sshfl [vmem:[#allocation1 + $0x10] sm:$0xff pattern:$0x75316420]
    %v180 = vld.sshfl [vmem:[#allocation1 + $0x18] sm:$0xff pattern:$0x75316420]
    %v185 = vmul.f32 %v61, %v175
    %v186 = vmul.f32 %v62, %v176
    %v187 = vmul.f32 %v63, %v179
    %v188 = vmul.f32 %v64, %v180
    %v189 = vsel %vm78, %v185, 0.0
    %v190 = vrot.slane %v189, 4
    %v191 = vadd.f32 %v189, %v190
    %v192 = vrot.slane %v191, 2
    %v193 = vadd.f32 %v191, %v192
    %v194 = vrot.slane %v193, 1
    %v195 = vadd.f32 %v193, %v194
    %v196 = vsel %vm78, %v186, 0.0
    %v197 = vrot.slane %v196, 4
    %v198 = vadd.f32 %v196, %v197
    %v199 = vrot.slane %v198, 2
    %v200 = vadd.f32 %v198, %v199
    %v201 = vrot.slane %v200, 1
    %v202 = vadd.f32 %v200, %v201
    %v203 = vsel %vm78, %v187, 0.0
    %v204 = vrot.slane %v203, 4
    %v205 = vadd.f32 %v203, %v204
    %v206 = vrot.slane %v205, 2
    %v207 = vadd.f32 %v205, %v206
    %v208 = vrot.slane %v207, 1
    %v209 = vadd.f32 %v207, %v208
    %v210 = vsel %vm78, %v188, 0.0
    %v211 = vrot.slane %v210, 4
    %v212 = vadd.f32 %v210, %v211
    %v213 = vrot.slane %v212, 2
    %v214 = vadd.f32 %v212, %v213
    %v215 = vrot.slane %v214, 1
    %v216 = vadd.f32 %v214, %v215
    %v217 = vsel %vm78, %v61, 0.0
    %v218 = vrot.slane %v217, 4
    %v219 = vadd.f32 %v217, %v218
    %v220 = vrot.slane %v219, 2
    %v221 = vadd.f32 %v219, %v220
    %v222 = vrot.slane %v221, 1
    %v223 = vadd.f32 %v221, %v222
    %v224 = vsel %vm78, %v62, 0.0
    %v225 = vrot.slane %v224, 4
    %v226 = vadd.f32 %v224, %v225
    %v227 = vrot.slane %v226, 2
    %v228 = vadd.f32 %v226, %v227
    %v229 = vrot.slane %v228, 1
    %v230 = vadd.f32 %v228, %v229
    %v231 = vsel %vm78, %v63, 0.0
    %v232 = vrot.slane %v231, 4
    %v233 = vadd.f32 %v231, %v232
    %v234 = vrot.slane %v233, 2
    %v235 = vadd.f32 %v233, %v234
    %v236 = vrot.slane %v235, 1
    %v237 = vadd.f32 %v235, %v236
    %v238 = vsel %vm78, %v64, 0.0
    %v239 = vrot.slane %v238, 4
    %v240 = vadd.f32 %v238, %v239
    %v241 = vrot.slane %v240, 2
    %v242 = vadd.f32 %v240, %v241
    %v243 = vrot.slane %v242, 1
    %v244 = vadd.f32 %v242, %v243
    %v245 = vmul.f32 %v223, %v165
    %v246 = vmul.f32 %v230, %v167
    %v247 = vmul.f32 %v237, %v169
    %v248 = vmul.f32 %v244, %v171
    %v249 = vsub.f32 %v245, %v195
    %v250 = vsub.f32 %v246, %v202
    %v251 = vsub.f32 %v247, %v209
    %v252 = vsub.f32 %v248, %v216
    %v253 = vld [vmem:[#allocation2] sm:$0x3]
    %v254 = vadd.f32 %v249, %v251
    %v255 = vadd.f32 %v250, %v252
    %v258 = vrot.slane %v255, 7
    %vm259 = vcmask 1040384
    %v260 = vsel %vm259, %v254, %v258
    %v262 = vadd.f32 %v253, %v260
    %v263 = vlaneseq
    %vm264 = vcmp.ge.s32.totalorder %v263, 0
    %vm265 = vcmp.lt.s32.totalorder %v263, 256
    %vm266 = vmand %vm264, %vm265
    %267 = vst.msk [vmem:[#allocation2] sm:$0x3] %vm266, %v262
    %v268 = vld [vmem:[#allocation3] sm:$0x3]
    %v269 = vadd.f32 %v223, %v237
    %v270 = vadd.f32 %v230, %v244
    %v273 = vrot.slane %v270, 7
    %v274 = vsel %vm259, %v269, %v273
    %v276 = vadd.f32 %v268, %v274
    %277 = vst.msk [vmem:[#allocation3] sm:$0x3] %vm266, %v276
    // Predicated region
    $region22: #{tpu_custom_call.1} parent=1 // pred_check
      %p278 = pneg %p31
    $region23: #{tpu_custom_call.1} parent=1 // pred_check_branch
      %280 = sbr.rel (%p278) target = $region25
    $region24: #{tpu_custom_call.1} parent=1 // pred_region
      %v281 = vld [vmem:[#allocation2] sm:$0x3]
      %v283 = vperm.slane %v281, 0
      %v284 = vperm.slane %v281, 1
      %v287 = vsel %vm259, %v283, 0.0
      %v288 = vsel %vm259, %v284, 0.0
      %v289 = vadd.f32 %v287, %v288
      %290 = vadd.xlane.f32.xlu0 %v289
      %v291 = vpop.xlane.xlu0 %290
      %v292 = vrot.slane %v291, 4
      %v293 = vadd.f32 %v291, %v292
      %v294 = vrot.slane %v293, 2
      %v295 = vadd.f32 %v293, %v294
      %v296 = vrot.slane %v295, 1
      %v297 = vadd.f32 %v295, %v296
      %s298 = vtos %v297
      %s299 = scalar_lea.smem [#allocation7], 0
      %300 = sst [smem:[%s299]] %s298
      %v301 = vld [vmem:[#allocation3] sm:$0x3]
      %v303 = vperm.slane %v301, 0
      %v304 = vperm.slane %v301, 1
      %v307 = vsel %vm259, %v303, 0.0
      %v308 = vsel %vm259, %v304, 0.0
      %v309 = vadd.f32 %v307, %v308
      %310 = vadd.xlane.f32.xlu0 %v309
      %v311 = vpop.xlane.xlu0 %310
      %v312 = vrot.slane %v311, 4
      %v313 = vadd.f32 %v311, %v312
      %v314 = vrot.slane %v313, 2
      %v315 = vadd.f32 %v313, %v314
      %v316 = vrot.slane %v315, 1
      %v317 = vadd.f32 %v315, %v316
      %s318 = vtos %v317
      %s319 = scalar_lea.smem [#allocation7], 1
      %320 = sst [smem:[%s319]] %s318
    $region25: #{tpu_custom_call.1} parent=1 // pred_fallthru
      _
    // Predicated region
    $region26: #{tpu_custom_call.1} parent=1 // pred_check
      _
    $region27: #{tpu_custom_call.1} parent=1 // pred_check_branch
      %322 = sbr.rel (0) target = $region29
    $region28: #{tpu_custom_call.1} parent=1 // pred_region
      %324 = vsyncadd [#allocation6], 0
      %s326 = sshll.u32 %s3, 4
      %s327 = int_to_ptr.hbm [resolvable:$true] %s326
      %329 = dma.smem_to_hbm [#allocation7], 16, %s327, [#allocation6]
    $region29: #{tpu_custom_call.1} parent=1 // pred_fallthru
      _
    // Predicated region
    $region30: #{tpu_custom_call.1} parent=1 // pred_check
      _
    $region31: #{tpu_custom_call.1} parent=1 // pred_check_branch
      %331 = sbr.rel (0) target = $region33
    $region32: #{tpu_custom_call.1} parent=1 // pred_region
      %333 = dma.done [#allocation6], 16
    $region33: #{tpu_custom_call.1} parent=1 // pred_fallthru
      _
    %334 = sfence
    %335 = vsyncpa [#allocation5], 1
    %336 = vsyncpa [#allocation6], 1

</llo_original>
